<compile_context>
chip_gen: v6e
topology: v6e:2x2x1
jax: 0.10.0
libtpu: 0.0.40
codegen_flags: <defaults>
</compile_context>

<pallas_src>
import functools

import numpy as np
import jax
import jax.numpy as jnp
from jax.experimental import pallas as pl
from jax.experimental.pallas import tpu as pltpu

_LANES = 128


def _normalize_gram_kernel(e_ref, g_ref):
    """Normalize rows of E once and compute G = E_n @ E_n.T on the MXU."""
    e = e_ref[...].astype(jnp.float32)
    sq = jnp.sum(e * e, axis=-1, keepdims=True)
    # rsqrt(max(sq, 1e-24)) == 1 / max(||e||, 1e-12)  (matches F.normalize eps).
    inv = jax.lax.rsqrt(jnp.maximum(sq, 1e-24))
    en = e * inv
    # Contract the D axis of both operands directly (no explicit transpose).
    g_ref[...] = jax.lax.dot_general(
        en, en, (((1,), (1,)), ((), ())), preferred_element_type=jnp.float32
    )


def _hinge_partial_kernel(gap_ref, gan_ref, out_ref, *, margin, num_triplets, tile_rows):
    """Per-tile hinge over lane-dense [tile_rows, 128] dot products -> (8,128) partial."""
    gap = gap_ref[...]
    gan = gan_ref[...]
    # ap - an = (2 - 2*G[a,p]) - (2 - 2*G[a,n]) = 2*(G[a,n] - G[a,p])
    hinge = jnp.maximum(2.0 * (gan - gap) + margin, 0.0)
    # Mask padded tail elements (they would otherwise add relu(margin) each).
    row = jax.lax.broadcasted_iota(jnp.int32, (tile_rows, _LANES), 0)
    lane = jax.lax.broadcasted_iota(jnp.int32, (tile_rows, _LANES), 1)
    flat = (pl.program_id(0) * tile_rows + row) * _LANES + lane
    hinge = jnp.where(flat < num_triplets, hinge, 0.0)
    # Lane-dense per-tile partial sum (8, 128); final mean happens in the wrapper.
    out_ref[...] = jnp.sum(hinge.reshape(tile_rows // 8, 8, _LANES), axis=0)


def all_triplets_selector(labels):
    """Deterministic selector: all (a, p, n) with label[a]==label[p], a!=p, label[n]!=label[a]."""
    labels = np.asarray(labels)
    triplets = []
    for a in range(len(labels)):
        for p in range(len(labels)):
            if p == a or labels[p] != labels[a]:
                continue
            for n in range(len(labels)):
                if labels[n] == labels[a]:
                    continue
                triplets.append((a, p, n))
    return np.asarray(triplets, dtype=np.int32).reshape(-1, 3)


def online_triplet_loss(embeddings, labels, *, margin, triplet_selector=all_triplets_selector):
    """Pallas implementation of OnlineTripletLoss.forward. Returns (mean_loss, num_triplets)."""
    triplets = triplet_selector(np.asarray(labels))  # static [T, 3] int32 (host-side mining)
    num_triplets = int(triplets.shape[0])
    if num_triplets == 0:
        # Guard: torch's losses.mean() would be NaN on an empty triplet set.
        return jnp.float32(0.0), 0

    N, D = embeddings.shape

    # --- Kernel 1: normalize once + Gram matrix on the MXU. ------------------
    # N (batch size) is small for this loss, so a single whole-array block is fine;
    # for very large N this would be gridded over (N/tm, N/tn) tiles.
    gram = pl.pallas_call(
        _normalize_gram_kernel,
        out_shape=jax.ShapeDtypeStruct((N, N), jnp.float32),
        in_specs=[pl.BlockSpec(memory_space=pltpu.MemorySpace.VMEM)],
        out_specs=pl.BlockSpec(memory_space=pltpu.MemorySpace.VMEM),
        cost_estimate=pl.CostEstimate(
            flops=2 * N * N * D + 4 * N * D,
            transcendentals=N,
            bytes_accessed=N * D * 4 + N * N * 4,
        ),
    )(embeddings)

    # --- Glue: gather 2*T scalars from G (tiny vs. the old 3*T*D row gather). --
    a_idx = jnp.asarray(triplets[:, 0])
    p_idx = jnp.asarray(triplets[:, 1])
    n_idx = jnp.asarray(triplets[:, 2])
    g_ap = gram[a_idx, p_idx]  # [T]
    g_an = gram[a_idx, n_idx]  # [T]

    # --- Kernel 2: gridded, pipelined hinge + partial sums over T. ------------
    rows_needed = pl.cdiv(num_triplets, _LANES)
    tile_rows = min(512, ((rows_needed + 7) // 8) * 8)  # sublane-aligned, big-ish tile
    n_tiles = pl.cdiv(rows_needed, tile_rows)
    total_rows = n_tiles * tile_rows
    t_pad = total_rows * _LANES

    g_ap = jnp.pad(g_ap, (0, t_pad - num_triplets)).reshape(total_rows, _LANES)
    g_an = jnp.pad(g_an, (0, t_pad - num_triplets)).reshape(total_rows, _LANES)

    kernel = functools.partial(
        _hinge_partial_kernel,
        margin=float(margin),
        num_triplets=num_triplets,
        tile_rows=tile_rows,
    )
    partials = pl.pallas_call(
        kernel,
        out_shape=jax.ShapeDtypeStruct((n_tiles * 8, _LANES), jnp.float32),
        grid=(n_tiles,),
        in_specs=[
            pl.BlockSpec((tile_rows, _LANES), lambda i: (i, 0)),
            pl.BlockSpec((tile_rows, _LANES), lambda i: (i, 0)),
        ],
        out_specs=pl.BlockSpec((8, _LANES), lambda i: (i, 0)),
        compiler_params=pltpu.CompilerParams(
            dimension_semantics=("parallel",),
            vmem_limit_bytes=32 << 20,
        ),
        cost_estimate=pl.CostEstimate(
            flops=5 * t_pad,
            transcendentals=0,
            bytes_accessed=2 * t_pad * 4 + n_tiles * 8 * _LANES * 4,
        ),
    )(g_ap, g_an)

    loss = jnp.sum(partials) / jnp.float32(num_triplets)
    return loss, num_triplets


def _reference(embeddings, triplets, margin):
    """Pure-JAX reference mirroring the PyTorch forward (sqrt/divide formulation)."""
    norm = jnp.sqrt(jnp.sum(embeddings * embeddings, axis=1, keepdims=True))
    e = embeddings / jnp.maximum(norm, 1e-12)
    ap = jnp.sum((e[triplets[:, 0]] - e[triplets[:, 1]]) ** 2, axis=1)
    an = jnp.sum((e[triplets[:, 0]] - e[triplets[:, 2]]) ** 2, axis=1)
    losses = jnp.maximum(ap - an + margin, 0.0)
    return jnp.mean(losses)


if __name__ == "__main__":
    key = jax.random.PRNGKey(0)
    N, D = 8, 32                      # batch of 8 embeddings, hidden=32
    margin = 1.0
    labels = np.array([0, 0, 0, 0, 1, 1, 1, 1], dtype=np.int32)
    embeddings = jax.random.normal(key, (N, D), dtype=jnp.float32)

    loss, n_triplets = online_triplet_loss(embeddings, labels, margin=margin)
    loss = jax.block_until_ready(loss)

    # Correctness check against a pure-JAX reference of the PyTorch semantics.
    ref = _reference(embeddings, all_triplets_selector(labels), margin)
    np.testing.assert_allclose(np.asarray(loss), np.asarray(ref), rtol=1e-5, atol=1e-5)
    assert n_triplets == 4 * 3 * 4 * 2  # 96 triplets for this label pattern

    # Zero-triplet guard (single-class batch).
    loss0, n0 = online_triplet_loss(embeddings, np.zeros(N, np.int32), margin=margin)
    assert n0 == 0 and float(loss0) == 0.0

    print("KERNEL_OK")
</pallas_src>

<mosaic_0001>
module attributes {stable_mosaic.version = 11 : i64} {
  func.func @_normalize_gram_kernel(%arg0: memref<8x32xf32, #tpu.memory_space<vmem>>, %arg1: memref<8x8xf32, #tpu.memory_space<vmem>>) attributes {dimension_semantics = [], scalar_prefetch = 0 : i64, scratch_operands = 0 : i64, tpu.core_type = #tpu.core_type<tc>} {
    %c0 = arith.constant 0 : index
    %c0_0 = arith.constant 0 : index
    %0 = vector.load %arg0[%c0, %c0_0] : memref<8x32xf32, #tpu.memory_space<vmem>>, vector<8x32xf32>
    %1 = arith.mulf %0, %0 : vector<8x32xf32>
    %cst = arith.constant dense<0.000000e+00> : vector<8xf32>
    %2 = vector.multi_reduction <add>, %1, %cst [1] : vector<8x32xf32> to vector<8xf32>
    %3 = vector.shape_cast %2 : vector<8xf32> to vector<8x1xf32>
    %cst_1 = arith.constant 1.000000e-24 : f32
    %4 = vector.broadcast %cst_1 : f32 to vector<8x1xf32>
    %5 = arith.maximumf %3, %4 : vector<8x1xf32>
    %6 = math.rsqrt %5 : vector<8x1xf32>
    %7 = vector.broadcast %6 : vector<8x1xf32> to vector<8x32xf32>
    %8 = arith.mulf %0, %7 : vector<8x32xf32>
    %cst_2 = arith.constant dense<0.000000e+00> : vector<8x8xf32>
    %9 = tpu.matmul %8, %8, %cst_2 {dimension_numbers = #tpu.dot_dimension_numbers<[1], [1], [0], [0], [0, 0, 1, 0], [], []>} : vector<8x32xf32>, vector<8x32xf32>, vector<8x8xf32> -> vector<8x8xf32>
    %c0_3 = arith.constant 0 : index
    %c0_4 = arith.constant 0 : index
    %10 = vector.load %arg1[%c0_3, %c0_4] : memref<8x8xf32, #tpu.memory_space<vmem>>, vector<8x8xf32>
    tpu.vector_store %arg1[%c0_3, %c0_4], %9 {strides = array<i32>} : memref<8x8xf32, #tpu.memory_space<vmem>>, vector<8x8xf32>,
    return
  }
}

</mosaic_0001>

<llo_original>
// kernel: tpu_custom_call.1
$region0: #{tpu_custom_call.1}
  #allocation0 [shape = 'u32[]', space=smem, size = 0x4, offset = 0x4, fixed_abs, tag = 'smem constant byte address 0x4 - core index']
  #allocation1 [shape = 'u32[144,128]{1,0:T(1,128)}', space=vmem, size = 0x12000, scoped, tag = 'internal scratch']
  %s0 = inlined_call_operand.hbm [shape: f32[8,32], index: 0, kind: input, shape index: {}]
  %s1 = inlined_call_operand.hbm [shape: f32[8,8], index: 1, kind: output, shape index: {}]
  %s2 = sld [smem:[#allocation0]]
  $region18: #{tpu_custom_call.1} parent=0
    _
  %s4 = ssub.s32 1, %s2
  %s5 = scalar_select 0, %s4, %s2
  $region1: #{tpu_custom_call.1} parent=0
    #allocation2 [shape = 'u8[4096]{0}', space=vmem, size = 0x1000, scoped, tag = 'input window, operand 0, single buffered']
    #allocation3 [shape = 's32[1]{0}', space=sflag, size = 0x4, scoped, tag = 'scoped memory for tpu_custom_call.1']
    #allocation4 [shape = 's32[1]{0}', space=sflag, size = 0x4, scoped, tag = 'scoped memory for tpu_custom_call.1']
    #allocation5 [shape = 'u8[4096]{0}', space=vmem, size = 0x1000, scoped, tag = 'output window, operand 0, single buffered']
    %6 = vsyncpa [#allocation3], 0
    %7 = vsyncpa [#allocation4], 0
    // Predicated region
    $region2: #{tpu_custom_call.1} parent=1 // pred_check
      _
    $region3: #{tpu_custom_call.1} parent=1 // pred_check_branch
      %9 = sbr.rel (0) target = $region5
    $region4: #{tpu_custom_call.1} parent=1 // pred_region
      %s11 = ssub.s32 128, 128
      %12 = vsyncadd [#allocation3], %s11
      %s14 = sshll.u32 [#allocation2], 4
      %s15 = int_to_ptr.vmem [resolvable:$true] %s14
      %17 = dma.hbm_to_vmem [thread:$0]  %s0, 128, %s15, [#allocation3]
    $region5: #{tpu_custom_call.1} parent=1 // pred_fallthru
      _
    // Predicated region
    $region6: #{tpu_custom_call.1} parent=1 // pred_check
      _
    $region7: #{tpu_custom_call.1} parent=1 // pred_check_branch
      %19 = sbr.rel (0) target = $region9
    $region8: #{tpu_custom_call.1} parent=1 // pred_region
      %20 = dma.done [#allocation3], 128
    $region9: #{tpu_custom_call.1} parent=1 // pred_fallthru
      _
    %v21 = vld [vmem:[#allocation2] sm:$0xff]
    %v22 = vmul.f32 %v21, %v21
    %vm23 = vcmask 261120
    %v24 = vsel %vm23, %v22, 0.0
    %25 = vadd.xlane.f32.xlu0 %v24
    %v26 = vpop.xlane.xlu0 %25
    %v27 = vmax.f32 %v26, 1e-24
    %v28 = vrsqrt.pop %v27
    %v29 = vmul.f32 %v21, %v28
    %v31 = vsel %vm23, %v29, 0
    %33 = vmatprep.subr.mxu0 0.0
    %34 = vmatpush1.xpose.msra.mxu0 0.0
    %35 = vmatprep.subr.mxu0 0.0
    %36 = vmatpush1.xpose.msra.mxu0 0.0
    %37 = vmatprep.subr.mxu0 0.0
    %38 = vmatpush1.xpose.msra.mxu0 0.0
    %39 = vmatprep.subr.mxu0 0.0
    %40 = vmatpush1.xpose.msra.mxu0 0.0
    %41 = vmatprep.subr.mxu0 0.0
    %42 = vmatpush1.xpose.msra.mxu0 0.0
    %43 = vmatprep.subr.mxu0 0.0
    %44 = vmatpush1.xpose.msra.mxu0 0.0
    %45 = vmatprep.subr.mxu0 0.0
    %46 = vmatpush1.xpose.msra.mxu0 0.0
    %47 = vmatprep.subr.mxu0 0.0
    %48 = vmatpush1.xpose.msra.mxu0 0.0
    %49 = vmatprep.subr.mxu0 0.0
    %50 = vmatpush1.xpose.msra.mxu0 0.0
    %51 = vmatprep.subr.mxu0 0.0
    %52 = vmatpush1.xpose.msra.mxu0 0.0
    %53 = vmatprep.subr.mxu0 0.0
    %54 = vmatpush1.xpose.msra.mxu0 0.0
    %55 = vmatprep.subr.mxu0 0.0
    %56 = vmatpush1.xpose.msra.mxu0 0.0
    %57 = vmatprep.subr.mxu0 0.0
    %58 = vmatpush1.xpose.msra.mxu0 0.0
    %59 = vmatprep.subr.mxu0 0.0
    %60 = vmatpush1.xpose.msra.mxu0 0.0
    %61 = vmatprep.subr.mxu0 0.0
    %62 = vmatpush1.xpose.msra.mxu0 0.0
    %63 = vmatprep.subr.mxu0 0.0
    %64 = vmatpush1.xpose.msra.mxu0 %v31
    %65 = vmatprep.subr.mxu0 0.0
    %66 = vmatpush2.xpose.msra.mxu0 0.0
    %67 = vmatprep.subr.mxu0 0.0
    %68 = vmatpush2.xpose.msra.mxu0 0.0
    %69 = vmatprep.subr.mxu0 0.0
    %70 = vmatpush2.xpose.msra.mxu0 0.0
    %71 = vmatprep.subr.mxu0 0.0
    %72 = vmatpush2.xpose.msra.mxu0 0.0
    %73 = vmatprep.subr.mxu0 0.0
    %74 = vmatpush2.xpose.msra.mxu0 0.0
    %75 = vmatprep.subr.mxu0 0.0
    %76 = vmatpush2.xpose.msra.mxu0 0.0
    %77 = vmatprep.subr.mxu0 0.0
    %78 = vmatpush2.xpose.msra.mxu0 0.0
    %79 = vmatprep.subr.mxu0 0.0
    %80 = vmatpush2.xpose.msra.mxu0 0.0
    %81 = vmatprep.subr.mxu0 0.0
    %82 = vmatpush2.xpose.msra.mxu0 0.0
    %83 = vmatprep.subr.mxu0 0.0
    %84 = vmatpush2.xpose.msra.mxu0 0.0
    %85 = vmatprep.subr.mxu0 0.0
    %86 = vmatpush2.xpose.msra.mxu0 0.0
    %87 = vmatprep.subr.mxu0 0.0
    %88 = vmatpush2.xpose.msra.mxu0 0.0
    %89 = vmatprep.subr.mxu0 0.0
    %90 = vmatpush2.xpose.msra.mxu0 0.0
    %91 = vmatprep.subr.mxu0 0.0
    %92 = vmatpush2.xpose.msra.mxu0 0.0
    %93 = vmatprep.subr.mxu0 0.0
    %94 = vmatpush2.xpose.msra.mxu0 0.0
    %95 = vmatprep.subr.mxu0 0.0
    %96 = vmatpush2.xpose.msra.mxu0 0.0
    %97 = vmatprep.mubr.f32.mxu0 0.0
    %98 = vmatmul.mubr.f32.gmra.mxu0 %v31
    %v99 = vpop.f32.mrf.mxu0
    %v100 = vadd.f32 0.0, %v99
    %v101 = vpop.f32.mrf.mxu0
    %102 = vdwg.mxu0
    %vm103 = vcmask 64512
    %104 = vst.msk [vmem:[#allocation5] sm:$0xff] %vm103, %v100
    // Predicated region
    $region10: #{tpu_custom_call.1} parent=1 // pred_check
      _
    $region11: #{tpu_custom_call.1} parent=1 // pred_check_branch
      %106 = sbr.rel (0) target = $region13
    $region12: #{tpu_custom_call.1} parent=1 // pred_region
      %s108 = ssub.s32 128, 128
      %109 = vsyncadd [#allocation4], %s108
      %s111 = sshll.u32 [#allocation5], 4
      %s112 = int_to_ptr.vmem [resolvable:$true] %s111
      %114 = dma.vmem_to_hbm [thread:$0]  %s112, 128, %s1, [#allocation4]
    $region13: #{tpu_custom_call.1} parent=1 // pred_fallthru
      _
    // Predicated region
    $region14: #{tpu_custom_call.1} parent=1 // pred_check
      _
    $region15: #{tpu_custom_call.1} parent=1 // pred_check_branch
      %116 = sbr.rel (0) target = $region17
    $region16: #{tpu_custom_call.1} parent=1 // pred_region
      %117 = dma.done [#allocation4], 128
    $region17: #{tpu_custom_call.1} parent=1 // pred_fallthru
      _
    %118 = vsyncpa [#allocation3], 1
    %119 = vsyncpa [#allocation4], 1

</llo_original>
